<compile_context>
chip_gen: v7x
topology: tpu7x:2x2x1
jax: 0.10.0
libtpu: 0.0.40
codegen_flags: <defaults>
</compile_context>

<pallas_src>
import jax
import jax.numpy as jnp
from jax.experimental import pallas as pl
from jax.experimental.pallas import tpu as pltpu


def _point_mlp_kernel(x_ref, w1_ref, b1_ref, w2_ref, b2_ref, o_ref):
    # x_ref: (C, TN) in the input dtype (pixels in lanes).
    # w1_ref: (hidden, C) bf16; b1_ref: (hidden, 1) f32.
    # w2_ref: (C, hidden) bf16; b2_ref: (C, 1) f32.
    # o_ref: (C, TN) in the output dtype.
    x = x_ref[...].astype(w1_ref.dtype)                      # bf16 for the MXU
    h = jnp.dot(w1_ref[...], x, preferred_element_type=jnp.float32)
    h = h + b1_ref[...]                                      # f32 bias
    h = h * jax.nn.sigmoid(h)                                # SiLU; sigmoid -> EUP
    y = jnp.dot(w2_ref[...], h.astype(w2_ref.dtype),
                preferred_element_type=jnp.float32)
    y = y + b2_ref[...]
    o_ref[...] = y.astype(o_ref.dtype)


def point_mlp(x, w1, b1, w2, b2, *, tile_n=4096, compute_dtype=jnp.bfloat16):
    """PointMlp forward.

    x:  (B, C, H, W)  NCHW, as in PyTorch.
    w1: (hidden, C)   first 1x1 conv weight (out_ch, in_ch).
    b1: (hidden,)
    w2: (C, hidden)   second 1x1 conv weight (out_ch, in_ch).
    b2: (C,)
    """
    B, C, H, W = x.shape
    hidden = w1.shape[0]
    assert w1.shape == (hidden, C) and b1.shape == (hidden,)
    assert w2.shape == (C, hidden) and b2.shape == (C,)

    # Free reshape (contiguous collapse of the trailing spatial dims).
    N = H * W
    x3 = x.reshape(B, C, N)

    # Pixel tile: multiple of 128 (lane width) when possible; if the whole
    # spatial extent is below one lane-vector, use the full (ragged) dim.
    tile_n = max(128, (int(tile_n) // 128) * 128)
    if N < 128:
        tn = N
    else:
        tn = min(tile_n, (N // 128) * 128)
    grid_n = pl.cdiv(N, tn)          # ragged tail tile handled by the pipeline

    # Weights in compute dtype (cast once, stay VMEM-resident); biases in f32
    # shaped to broadcast across the lane (pixel) dim.
    w1c = w1.astype(compute_dtype)                 # (hidden, C)
    w2c = w2.astype(compute_dtype)                 # (C, hidden)
    b1c = b1.astype(jnp.float32).reshape(hidden, 1)
    b2c = b2.astype(jnp.float32).reshape(C, 1)

    # Tight scoped-VMEM budget: double-buffered x/out tiles + resident params
    # + f32 intermediates, x2 safety + headroom, capped at 32 MiB.
    in_sz = jnp.dtype(x.dtype).itemsize
    w_sz = jnp.dtype(compute_dtype).itemsize
    need = 2 * tn * C * in_sz                      # x tile, double-buffered
    need += 2 * tn * C * in_sz                     # out tile, double-buffered
    need += 2 * w_sz * 2 * hidden * C              # w1 + w2 (2 bufs each)
    need += 2 * 4 * (hidden + C)                   # biases
    need += 4 * tn * (hidden + C)                  # f32 intermediates h, y
    vmem_bytes = int(min(max(2 * need + (8 << 20), 16 << 20), 32 << 20))

    out = pl.pallas_call(
        _point_mlp_kernel,
        out_shape=jax.ShapeDtypeStruct((B, C, N), x.dtype),
        grid_spec=pltpu.PrefetchScalarGridSpec(
            num_scalar_prefetch=0,
            grid=(B, grid_n),
            in_specs=[
                pl.BlockSpec((None, C, tn), lambda b, j: (b, 0, j)),   # x pixels
                pl.BlockSpec((hidden, C), lambda b, j: (0, 0)),        # w1 (resident)
                pl.BlockSpec((hidden, 1), lambda b, j: (0, 0)),        # b1
                pl.BlockSpec((C, hidden), lambda b, j: (0, 0)),        # w2 (resident)
                pl.BlockSpec((C, 1), lambda b, j: (0, 0)),             # b2
            ],
            out_specs=pl.BlockSpec((None, C, tn), lambda b, j: (b, 0, j)),
        ),
        compiler_params=pltpu.CompilerParams(
            dimension_semantics=("parallel", "parallel"),
            vmem_limit_bytes=vmem_bytes,
        ),
    )(x3, w1c, b1c, w2c, b2c)

    return out.reshape(B, C, H, W)


if __name__ == "__main__":
    key = jax.random.PRNGKey(0)
    k1, k2, k3, k4, k5 = jax.random.split(key, 5)

    B, C, H, W = 2, 32, 16, 16        # small demo shape (dim=32)
    mlp_ratio = 4
    hidden = C * mlp_ratio            # 128

    x = jax.random.normal(k1, (B, C, H, W), dtype=jnp.float32)
    w1 = jax.random.normal(k2, (hidden, C), dtype=jnp.float32) * 0.05
    b1 = jax.random.normal(k3, (hidden,), dtype=jnp.float32) * 0.05
    w2 = jax.random.normal(k4, (C, hidden), dtype=jnp.float32) * 0.05
    b2 = jax.random.normal(k5, (C,), dtype=jnp.float32) * 0.05

    # Small tile_n here so the tiny demo still exercises a multi-step grid;
    # production shapes use the default (4096).
    y = point_mlp(x, w1, b1, w2, b2, tile_n=128)
    jax.block_until_ready(y)

    # Plain-JAX reference: 1x1 conv == channel matmul at each pixel.
    h = jnp.einsum("bchw,oc->bohw", x, w1) + b1[None, :, None, None]
    h = h * jax.nn.sigmoid(h)
    ref = jnp.einsum("bohw,co->bchw", h, w2) + b2[None, :, None, None]

    err = float(jnp.max(jnp.abs(y - ref)))
    assert jnp.allclose(y, ref, atol=2e-2, rtol=2e-2), err

    print("KERNEL_OK")
</pallas_src>

<mosaic_0001>
module attributes {stable_mosaic.version = 11 : i64} {
  func.func @_point_mlp_kernel(%arg0: i32, %arg1: i32, %arg2: memref<1x32x128xf32, #tpu.memory_space<vmem>>, %arg3: memref<128x32xbf16, #tpu.memory_space<vmem>>, %arg4: memref<128x1xf32, #tpu.memory_space<vmem>>, %arg5: memref<32x128xbf16, #tpu.memory_space<vmem>>, %arg6: memref<32x1xf32, #tpu.memory_space<vmem>>, %arg7: memref<1x32x128xf32, #tpu.memory_space<vmem>>) attributes {dimension_semantics = [#tpu.dimension_semantics<parallel>, #tpu.dimension_semantics<parallel>], iteration_bounds = array<i64: 2, 2>, scalar_prefetch = 0 : i64, scratch_operands = 0 : i64, tpu.core_type = #tpu.core_type<tc>, window_params = [{transform_indices = @transform_0, window_bounds = array<i64: 1, 32, 128>}, {pipeline_mode = #tpu.pipeline_mode<synchronous>, transform_indices = @transform_1, window_bounds = array<i64: 128, 32>}, {pipeline_mode = #tpu.pipeline_mode<synchronous>, transform_indices = @transform_2, window_bounds = array<i64: 128, 1>}, {pipeline_mode = #tpu.pipeline_mode<synchronous>, transform_indices = @transform_3, window_bounds = array<i64: 32, 128>}, {pipeline_mode = #tpu.pipeline_mode<synchronous>, transform_indices = @transform_4, window_bounds = array<i64: 32, 1>}, {transform_indices = @transform_5, window_bounds = array<i64: 1, 32, 128>}]} {
    %c0 = arith.constant 0 : index
    %c0_0 = arith.constant 0 : index
    %c0_1 = arith.constant 0 : index
    %0 = vector.load %arg2[%c0, %c0_0, %c0_1] : memref<1x32x128xf32, #tpu.memory_space<vmem>>, vector<1x32x128xf32>
    %1 = vector.shape_cast %0 : vector<1x32x128xf32> to vector<32x128xf32>
    %2 = arith.truncf %1 : vector<32x128xf32> to vector<32x128xbf16>
    %c0_2 = arith.constant 0 : index
    %c0_3 = arith.constant 0 : index
    %3 = vector.load %arg3[%c0_2, %c0_3] : memref<128x32xbf16, #tpu.memory_space<vmem>>, vector<128x32xbf16>
    %cst = arith.constant dense<0.000000e+00> : vector<128x128xf32>
    %4 = tpu.matmul %3, %2, %cst {dimension_numbers = #tpu.dot_dimension_numbers<[1], [0], [0], [1], [0, 0, 1, 1], [], []>} : vector<128x32xbf16>, vector<32x128xbf16>, vector<128x128xf32> -> vector<128x128xf32>
    %c0_4 = arith.constant 0 : index
    %c0_5 = arith.constant 0 : index
    %5 = vector.load %arg4[%c0_4, %c0_5] : memref<128x1xf32, #tpu.memory_space<vmem>>, vector<128x1xf32>
    %6 = vector.broadcast %5 : vector<128x1xf32> to vector<128x128xf32>
    %7 = arith.addf %4, %6 : vector<128x128xf32>
    %8 = arith.negf %7 : vector<128x128xf32>
    %9 = math.exp %8 : vector<128x128xf32>
    %cst_6 = arith.constant 1.000000e+00 : f32
    %10 = vector.broadcast %cst_6 : f32 to vector<128x128xf32>
    %11 = arith.addf %10, %9 : vector<128x128xf32>
    %12 = arith.divf %10, %11 : vector<128x128xf32>
    %13 = arith.mulf %7, %12 : vector<128x128xf32>
    %c0_7 = arith.constant 0 : index
    %c0_8 = arith.constant 0 : index
    %14 = vector.load %arg5[%c0_7, %c0_8] : memref<32x128xbf16, #tpu.memory_space<vmem>>, vector<32x128xbf16>
    %15 = arith.truncf %13 : vector<128x128xf32> to vector<128x128xbf16>
    %cst_9 = arith.constant dense<0.000000e+00> : vector<32x128xf32>
    %16 = tpu.matmul %14, %15, %cst_9 {dimension_numbers = #tpu.dot_dimension_numbers<[1], [0], [0], [1], [0, 0, 1, 1], [], []>} : vector<32x128xbf16>, vector<128x128xbf16>, vector<32x128xf32> -> vector<32x128xf32>
    %c0_10 = arith.constant 0 : index
    %c0_11 = arith.constant 0 : index
    %17 = vector.load %arg6[%c0_10, %c0_11] : memref<32x1xf32, #tpu.memory_space<vmem>>, vector<32x1xf32>
    %18 = vector.broadcast %17 : vector<32x1xf32> to vector<32x128xf32>
    %19 = arith.addf %16, %18 : vector<32x128xf32>
    %c0_12 = arith.constant 0 : index
    %c0_13 = arith.constant 0 : index
    %c0_14 = arith.constant 0 : index
    %20 = vector.load %arg7[%c0_12, %c0_13, %c0_14] : memref<1x32x128xf32, #tpu.memory_space<vmem>>, vector<1x32x128xf32>
    %21 = vector.shape_cast %20 : vector<1x32x128xf32> to vector<32x128xf32>
    %22 = vector.shape_cast %19 : vector<32x128xf32> to vector<1x32x128xf32>
    tpu.vector_store %arg7[%c0_12, %c0_13, %c0_14], %22 {strides = array<i32>} : memref<1x32x128xf32, #tpu.memory_space<vmem>>, vector<1x32x128xf32>,
    return
  }
  func.func @transform_0(%arg0: i32, %arg1: i32) -> (i32, i32, i32) {
    %c0_i32 = arith.constant 0 : i32
    %c0_i32_0 = arith.constant 0 : i32
    return %arg0, %c0_i32, %arg1 : i32, i32, i32
  }
  func.func @transform_1(%arg0: i32, %arg1: i32) -> (i32, i32) {
    %c0_i32 = arith.constant 0 : i32
    %c0_i32_0 = arith.constant 0 : i32
    %c0_i32_1 = arith.constant 0 : i32
    return %c0_i32, %c0_i32_0 : i32, i32
  }
  func.func @transform_2(%arg0: i32, %arg1: i32) -> (i32, i32) {
    %c0_i32 = arith.constant 0 : i32
    %c0_i32_0 = arith.constant 0 : i32
    %c0_i32_1 = arith.constant 0 : i32
    return %c0_i32, %c0_i32_0 : i32, i32
  }
  func.func @transform_3(%arg0: i32, %arg1: i32) -> (i32, i32) {
    %c0_i32 = arith.constant 0 : i32
    %c0_i32_0 = arith.constant 0 : i32
    %c0_i32_1 = arith.constant 0 : i32
    return %c0_i32, %c0_i32_0 : i32, i32
  }
  func.func @transform_4(%arg0: i32, %arg1: i32) -> (i32, i32) {
    %c0_i32 = arith.constant 0 : i32
    %c0_i32_0 = arith.constant 0 : i32
    %c0_i32_1 = arith.constant 0 : i32
    return %c0_i32, %c0_i32_0 : i32, i32
  }
  func.func @transform_5(%arg0: i32, %arg1: i32) -> (i32, i32, i32) {
    %c0_i32 = arith.constant 0 : i32
    %c0_i32_0 = arith.constant 0 : i32
    return %arg0, %c0_i32, %arg1 : i32, i32, i32
  }
}

</mosaic_0001>

<llo_original>
// kernel: tpu_custom_call.1
$region0: #{tpu_custom_call.1}
  #allocation0 [shape = 'u32[]', space=smem, size = 0x4, offset = 0x4, fixed_abs, tag = 'smem constant byte address 0x4 - core index']
  #allocation1 [shape = 'u32[144,128]{1,0:T(1,128)}', space=vmem, size = 0x12000, scoped, tag = 'internal scratch']
  %s0 = inlined_call_operand.vmem [shape: f32[2,32,256], index: 0, kind: input, shape index: {}]
  %s1 = inlined_call_operand.vmem [shape: bf16[128,32], index: 1, kind: input, shape index: {}]
  %s2 = inlined_call_operand.vmem [shape: f32[128,1], index: 2, kind: input, shape index: {}]
  %s3 = inlined_call_operand.vmem [shape: bf16[32,128], index: 3, kind: input, shape index: {}]
  %s4 = inlined_call_operand.vmem [shape: f32[32,1], index: 4, kind: input, shape index: {}]
  %s5 = inlined_call_operand.hbm [shape: f32[2,32,256], index: 5, kind: output, shape index: {}]
  %s6 = sld [smem:[#allocation0]]
  $region91: #{tpu_custom_call.1} parent=0
    _
  %s8 = ssub.s32 1, %s6
  %s9 = scalar_select 0, %s8, %s6
  $region1: #{tpu_custom_call.1} parent=0
    #allocation2 [shape = 'u8[32768]{0}', space=vmem, size = 0x8000, scoped, tag = 'input window, operand 0']
    #allocation3 [shape = 'u8[32768]{0}', space=vmem, size = 0x8000, scoped, tag = 'output window, operand 0']
    #allocation4 [shape = 's32[2]{0}', space=sflag, size = 0x8, scoped, tag = 'scoped memory for tpu_custom_call.1']
    %10 = vsyncpa [#allocation4], 0
    %s11 = scalar_lea.sflag [#allocation4], 1
    %12 = vsyncpa %s11, 0
    loop: start=0, step=1, limit=6
    $region2: #{tpu_custom_call.1} parent=1 // loop_pre_header
      _
    $region3: #{tpu_custom_call.1} parent=1 // loop_header
      %s14 = sphi 0, %s18
      %p15 = scmp.ge.s32.totalorder %s14, 6
      %s21 = sphi 0, %s33
      %s22 = sphi 0, %s29
      %s23 = sphi 0, %s21
      %s24 = sphi 0, %s22
      %s25 = sphi 0, %s23
      %s26 = sphi 0, %s24
      %s38 = sphi 0, %s40
      %s41 = sphi 0, %s38
      %s42 = sphi 0, %s41
      %s58 = sphi 0, %s42
      %s62 = sphi 0, %s62
      %s64 = sphi 0, %s62
      %s65 = sphi 0, %s64
      %s79 = sphi 0, %s65
      %s83 = sphi 0, %s83
      %s85 = sphi 0, %s83
      %s86 = sphi 0, %s85
      %s100 = sphi 0, %s86
      %s104 = sphi 0, %s104
      %s106 = sphi 0, %s104
      %s107 = sphi 0, %s106
      %s121 = sphi 0, %s107
      %s125 = sphi 0, %s125
      %s127 = sphi 0, %s125
      %s128 = sphi 0, %s127
      %s142 = sphi 0, %s128
      %s150 = sphi 0, %s152
      %s153 = sphi 0, %s150
      %s154 = sphi 0, %s153
      %s170 = sphi 0, %s154
    $region4: #{tpu_custom_call.1} parent=1 // loop_header_branch
      %17 = sbr.rel (%p15) target = $region8
    $region5: #{tpu_custom_call.1} parent=1 // loop_body
      %s19 = ssub.s32 %s14, 1
      %s20 = ssub.s32 %s14, 2
      %s27 = sadd.s32 1, %s22
      %p28 = scmp.ge.s32.totalorder %s27, 2
      %s29 = scalar_select %p28, 0, %s27
      %s30 = sadd.s32 1, %s21
      %s31 = scalar_select %p28, %s30, %s21
      %p32 = scmp.ge.s32.totalorder %s31, 2
      %s33 = scalar_select %p32, 0, %s31
      %s34 = ssub.s32 %s21, %s33
      %s35 = ssub.s32 %s22, %s29
      %s36 = sor.u32 %s34, %s35
      %p37 = scmp.eq.s32.totalorder %s36, 0
      %s39 = sadd.s32 %s38, 1
      %s40 = scalar_select %p37, %s38, %s39
      %p43 = pneg %p37
      %p44 = scmp.eq.s32.totalorder %s14, 3
      %p45 = por %p43, %p44
      %p46 = scmp.ne.s32.totalorder %s38, %s41
      %p47 = scmp.eq.s32.totalorder %s14, 0
      %p48 = por %p46, %p47
      %p49 = scmp.ne.s32.totalorder %s38, %s41
      %p50 = scmp.eq.s32.totalorder %s19, 3
      %p51 = por %p49, %p50
      %p52 = scmp.ne.s32.totalorder %s41, %s42
      %p53 = scmp.eq.s32.totalorder %s19, 0
      %p54 = por %p52, %p53
      %p55 = scmp.ne.s32.totalorder %s41, %s42
      %p56 = scmp.eq.s32.totalorder %s20, 3
      %p57 = por %p55, %p56
      %p59 = scmp.ne.s32.totalorder %s42, %s58
      %p60 = scmp.eq.s32.totalorder %s20, 0
      %p61 = por %p59, %p60
      %s63 = sadd.s32 %s62, 1
      %p66 = scmp.eq.s32.totalorder %s14, 3
      %p67 = scmp.ne.s32.totalorder %s62, %s64
      %p68 = scmp.eq.s32.totalorder %s14, 0
      %p69 = por %p67, %p68
      %p70 = scmp.ne.s32.totalorder %s62, %s64
      %p71 = scmp.eq.s32.totalorder %s19, 3
      %p72 = por %p70, %p71
      %p73 = scmp.ne.s32.totalorder %s64, %s65
      %p74 = scmp.eq.s32.totalorder %s19, 0
      %p75 = por %p73, %p74
      %p76 = scmp.ne.s32.totalorder %s64, %s65
      %p77 = scmp.eq.s32.totalorder %s20, 3
      %p78 = por %p76, %p77
      %p80 = scmp.ne.s32.totalorder %s65, %s79
      %p81 = scmp.eq.s32.totalorder %s20, 0
      %p82 = por %p80, %p81
      %s84 = sadd.s32 %s83, 1
      %p87 = scmp.eq.s32.totalorder %s14, 3
      %p88 = scmp.ne.s32.totalorder %s83, %s85
      %p89 = scmp.eq.s32.totalorder %s14, 0
      %p90 = por %p88, %p89
      %p91 = scmp.ne.s32.totalorder %s83, %s85
      %p92 = scmp.eq.s32.totalorder %s19, 3
      %p93 = por %p91, %p92
      %p94 = scmp.ne.s32.totalorder %s85, %s86
      %p95 = scmp.eq.s32.totalorder %s19, 0
      %p96 = por %p94, %p95
      %p97 = scmp.ne.s32.totalorder %s85, %s86
      %p98 = scmp.eq.s32.totalorder %s20, 3
      %p99 = por %p97, %p98
      %p101 = scmp.ne.s32.totalorder %s86, %s100
      %p102 = scmp.eq.s32.totalorder %s20, 0
      %p103 = por %p101, %p102
      %s105 = sadd.s32 %s104, 1
      %p108 = scmp.eq.s32.totalorder %s14, 3
      %p109 = scmp.ne.s32.totalorder %s104, %s106
      %p110 = scmp.eq.s32.totalorder %s14, 0
      %p111 = por %p109, %p110
      %p112 = scmp.ne.s32.totalorder %s104, %s106
      %p113 = scmp.eq.s32.totalorder %s19, 3
      %p114 = por %p112, %p113
      %p115 = scmp.ne.s32.totalorder %s106, %s107
      %p116 = scmp.eq.s32.totalorder %s19, 0
      %p117 = por %p115, %p116
      %p118 = scmp.ne.s32.totalorder %s106, %s107
      %p119 = scmp.eq.s32.totalorder %s20, 3
      %p120 = por %p118, %p119
      %p122 = scmp.ne.s32.totalorder %s107, %s121
      %p123 = scmp.eq.s32.totalorder %s20, 0
      %p124 = por %p122, %p123
      %s126 = sadd.s32 %s125, 1
      %p129 = scmp.eq.s32.totalorder %s14, 3
      %p130 = scmp.ne.s32.totalorder %s125, %s127
      %p131 = scmp.eq.s32.totalorder %s14, 0
      %p132 = por %p130, %p131
      %p133 = scmp.ne.s32.totalorder %s125, %s127
      %p134 = scmp.eq.s32.totalorder %s19, 3
      %p135 = por %p133, %p134
      %p136 = scmp.ne.s32.totalorder %s127, %s128
      %p137 = scmp.eq.s32.totalorder %s19, 0
      %p138 = por %p136, %p137
      %p139 = scmp.ne.s32.totalorder %s127, %s128
      %p140 = scmp.eq.s32.totalorder %s20, 3
      %p141 = por %p139, %p140
      %p143 = scmp.ne.s32.totalorder %s128, %s142
      %p144 = scmp.eq.s32.totalorder %s20, 0
      %p145 = por %p143, %p144
      %s146 = ssub.s32 %s21, %s33
      %s147 = ssub.s32 %s22, %s29
      %s148 = sor.u32 %s146, %s147
      %p149 = scmp.eq.s32.totalorder %s148, 0
      %s151 = sadd.s32 %s150, 1
      %s152 = scalar_select %p149, %s150, %s151
      %p155 = pneg %p149
      %p156 = scmp.eq.s32.totalorder %s14, 3
      %p157 = por %p155, %p156
      %p158 = scmp.ne.s32.totalorder %s150, %s153
      %p159 = scmp.eq.s32.totalorder %s14, 0
      %p160 = por %p158, %p159
      %p161 = scmp.ne.s32.totalorder %s150, %s153
      %p162 = scmp.eq.s32.totalorder %s19, 3
      %p163 = por %p161, %p162
      %p164 = scmp.ne.s32.totalorder %s153, %s154
      %p165 = scmp.eq.s32.totalorder %s19, 0
      %p166 = por %p164, %p165
      %p167 = scmp.ne.s32.totalorder %s153, %s154
      %p168 = scmp.eq.s32.totalorder %s20, 3
      %p169 = por %p167, %p168
      %p171 = scmp.ne.s32.totalorder %s154, %s170
      %p172 = scmp.eq.s32.totalorder %s20, 0
      %p173 = por %p171, %p172
      %p174 = scmp.le.s32.totalorder 1, %s14
      %p175 = scmp.lt.s32.totalorder %s14, 5
      %p176 = pnand %p174, %p175
      %p177 = pneg %p176
      // Predicated region
      $region9: #{tpu_custom_call.1} parent=5 // pred_check
        _
      $region10: #{tpu_custom_call.1} parent=5 // pred_check_branch
        %179 = sbr.rel (%p176) target = $region12
      $region11: #{tpu_custom_call.1} parent=5 // pred_region
        %s180 = ssub.s32 %s14, 1
        // Predicated region
        $region13: #{tpu_custom_call.1} parent=11 // pred_check
          %p181 = pneg %p75
        $region14: #{tpu_custom_call.1} parent=11 // pred_check_branch
          %183 = sbr.rel (%p181) target = $region16
        $region15: #{tpu_custom_call.1} parent=11 // pred_region
          _
        $region16: #{tpu_custom_call.1} parent=11 // pred_fallthru
          _
        // Predicated region
        $region17: #{tpu_custom_call.1} parent=11 // pred_check
          %p184 = pneg %p96
        $region18: #{tpu_custom_call.1} parent=11 // pred_check_branch
          %186 = sbr.rel (%p184) target = $region20
        $region19: #{tpu_custom_call.1} parent=11 // pred_region
          _
        $region20: #{tpu_custom_call.1} parent=11 // pred_fallthru
          _
        // Predicated region
        $region21: #{tpu_custom_call.1} parent=11 // pred_check
          %p187 = pneg %p117
        $region22: #{tpu_custom_call.1} parent=11 // pred_check_branch
          %189 = sbr.rel (%p187) target = $region24
        $region23: #{tpu_custom_call.1} parent=11 // pred_region
          _
        $region24: #{tpu_custom_call.1} parent=11 // pred_fallthru
          _
        // Predicated region
        $region25: #{tpu_custom_call.1} parent=11 // pred_check
          %p190 = pneg %p138
        $region26: #{tpu_custom_call.1} parent=11 // pred_check_branch
          %192 = sbr.rel (%p190) target = $region28
        $region27: #{tpu_custom_call.1} parent=11 // pred_region
          _
        $region28: #{tpu_custom_call.1} parent=11 // pred_fallthru
          _
      $region12: #{tpu_custom_call.1} parent=5 // pred_fallthru
        _
      %p193 = scmp.lt.s32.totalorder %s14, 4
      // Predicated region
      $region29: #{tpu_custom_call.1} parent=5 // pred_check
        %p194 = pneg %p193
      $region30: #{tpu_custom_call.1} parent=5 // pred_check_branch
        %196 = sbr.rel (%p194) target = $region32
      $region31: #{tpu_custom_call.1} parent=5 // pred_region
        // Predicated region
        $region33: #{tpu_custom_call.1} parent=31 // pred_check
          %p197 = pneg %p48
        $region34: #{tpu_custom_call.1} parent=31 // pred_check_branch
          %199 = sbr.rel (%p197) target = $region36
        $region35: #{tpu_custom_call.1} parent=31 // pred_region
          %s200 = sand.u32 %s38, 1
          %s201 = sand.u32 %s38, 1
          %s202 = smul.addr %s201, 32
          %s203 = scalar_lea.vmem [#allocation2], %s202
          %s204 = smul.addr %s21, 8
          %s205 = sadd.s32 %s22, %s204
          %s206 = smul.addr %s205, 8
          %s207 = scalar_lea.vmem %s0, %s206
          // Predicated region
          $region37: #{tpu_custom_call.1} parent=35 // pred_check
            _
          $region38: #{tpu_custom_call.1} parent=35 // pred_check_branch
            %209 = sbr.rel (0) target = $region40
          $region39: #{tpu_custom_call.1} parent=35 // pred_region
            // Predicated region
            $region41: #{tpu_custom_call.1} parent=39 // pred_check
              _
            $region42: #{tpu_custom_call.1} parent=39 // pred_check_branch
              %211 = sbr.rel (0) target = $region44
            $region43: #{tpu_custom_call.1} parent=39 // pred_region
              // Predicated region
              $region56: #{tpu_custom_call.1} parent=43 // pred_check
                _
              $region57: #{tpu_custom_call.1} parent=43 // pred_check_branch
                %232 = sbr.rel (0) target = $region59
              $region58: #{tpu_custom_call.1} parent=43 // pred_region
                loop: start=0, step=1, limit=1
                $region60: #{tpu_custom_call.1} parent=58 // loop_pre_header
                  _
                $region61: #{tpu_custom_call.1} parent=58 // loop_header
                  %s234 = sphi 0, %s238
                  %p235 = scmp.ge.s32.totalorder %s234, 1
                  %s239 = sphi %s207, %s207
                  %s240 = sphi %s203, %s203
                $region62: #{tpu_custom_call.1} parent=58 // loop_header_branch
                  %237 = sbr.rel (%p235) target = $region66
                $region63: #{tpu_custom_call.1} parent=58 // loop_body
                  %v241 = vld [vmem:[%s239] sm:$0xff]
                  %242 = vst [vmem:[%s240] sm:$0xff] %v241
                  %v243 = vld [vmem:[%s239 + $0x10] sm:$0xff]
                  %244 = vst [vmem:[%s240 + $0x8] sm:$0xff] %v243
                  %v245 = vld [vmem:[%s239 + $0x20] sm:$0xff]
                  %246 = vst [vmem:[%s240 + $0x10] sm:$0xff] %v245
                  %v247 = vld [vmem:[%s239 + $0x30] sm:$0xff]
                  %248 = vst [vmem:[%s240 + $0x18] sm:$0xff] %v247
                $region64: #{tpu_custom_call.1} parent=58 // loop_footer
                  %s238 = sadd.s32 1, %s234
                $region65: #{tpu_custom_call.1} parent=58 // loop_footer_branch
                  %233 = sbr.rel target = $region61
                $region66: #{tpu_custom_call.1} parent=58 // loop_exit
                  _
              $region59: #{tpu_custom_call.1} parent=43 // pred_fallthru
                _
              // Predicated region
              $region67: #{tpu_custom_call.1} parent=43 // pred_check
                _
              $region68: #{tpu_custom_call.1} parent=43 // pred_check_branch
                %250 = sbr.rel target = $region70
              $region69: #{tpu_custom_call.1} parent=43 // pred_region
                _
              $region70: #{tpu_custom_call.1} parent=43 // pred_fallthru
                _
            $region44: #{tpu_custom_call.1} parent=39 // pred_fallthru
              _
            // Predicated region
            $region45: #{tpu_custom_call.1} parent=39 // pred_check
              _
            $region46: #{tpu_custom_call.1} parent=39 // pred_check_branch
              %213 = sbr.rel target = $region48
            $region47: #{tpu_custom_call.1} parent=39 // pred_region
              loop: start=0, step=1, limit=1
              $region49: #{tpu_custom_call.1} parent=47 // loop_pre_header
                _
              $region50: #{tpu_custom_call.1} parent=47 // loop_header
                %s216 = sphi 0, %s220
                %p217 = scmp.ge.s32.totalorder %s216, 1
                %s221 = sphi %s207, %s207
                %s222 = sphi %s203, %s203
              $region51: #{tpu_custom_call.1} parent=47 // loop_header_branch
                %219 = sbr.rel (%p217) target = $region55
              $region52: #{tpu_custom_call.1} parent=47 // loop_body
                %v223 = vld [vmem:[%s221] sm:$0xff]
                %224 = vst [vmem:[%s222] sm:$0xff] %v223
                %v225 = vld [vmem:[%s221 + $0x10] sm:$0xff]
                %226 = vst [vmem:[%s222 + $0x8] sm:$0xff] %v225
                %v227 = vld [vmem:[%s221 + $0x20] sm:$0xff]
                %228 = vst [vmem:[%s222 + $0x10] sm:$0xff] %v227
                %v229 = vld [vmem:[%s221 + $0x30] sm:$0xff]
                %230 = vst [vmem:[%s222 + $0x18] sm:$0xff] %v229
              $region53: #{tpu_custom_call.1} parent=47 // loop_footer
                %s220 = sadd.s32 1, %s216
              $region54: #{tpu_custom_call.1} parent=47 // loop_footer_branch
                %215 = sbr.rel target = $region50
              $region55: #{tpu_custom_call.1} parent=47 // loop_exit
                _
            $region48: #{tpu_custom_call.1} parent=39 // pred_fallthru
              _
          $region40: #{tpu_custom_call.1} parent=35 // pred_fallthru
            _
          %251 = vnop
        $region36: #{tpu_custom_call.1} parent=31 // pred_fallthru
          _
      $region32: #{tpu_custom_call.1} parent=5 // pred_fallthru
        _
      %p252 = scmp.le.s32.totalorder 1, %s14
      %p253 = scmp.lt.s32.totalorder %s14, 5
      %p254 = pnand %p252, %p253
      %p255 = pneg %p254
      // Predicated region
      $region71: #{tpu_custom_call.1} parent=5 // pred_check
        _
      $region72: #{tpu_custom_call.1} parent=5 // pred_check_branch
        %257 = sbr.rel (%p254) target = $region74
      $region73: #{tpu_custom_call.1} parent=5 // pred_region
        %s258 = ssub.s32 %s14, 1
        %s259 = sand.u32 %s41, 1
        %s260 = sand.u32 %s41, 1
        %s261 = smul.addr %s260, 32
        %s262 = scalar_lea.vmem [#allocation2], %s261
        // Predicated region
        $region75: #{tpu_custom_call.1} parent=73 // pred_check
          %p263 = pneg %p54
        $region76: #{tpu_custom_call.1} parent=73 // pred_check_branch
          %265 = sbr.rel (%p263) target = $region78
        $region77: #{tpu_custom_call.1} parent=73 // pred_region
          _
        $region78: #{tpu_custom_call.1} parent=73 // pred_fallthru
          _
        %s266 = sand.u32 %s41, 1
        %s267 = sand.u32 %s41, 1
        %s268 = smul.addr %s267, 32
        %s269 = scalar_lea.vmem [#allocation2], %s268
        %p270 = pneg %p54
        %p271 = pneg %p51
        %p272 = pneg %p75
        %p273 = pneg %p72
        %p274 = pneg %p96
        %p275 = pneg %p93
        %p276 = pneg %p117
        %p277 = pneg %p114
        %p278 = pneg %p138
        %p279 = pneg %p135
        %p280 = pneg %p166
        %p281 = pneg %p163
        %s282 = sand.u32 %s153, 1
        %s283 = scalar_lea.sflag [#allocation4], %s282
        %s284 = sand.u32 %s153, 1
        %s285 = smul.addr %s284, 32
        %s286 = scalar_lea.vmem [#allocation3], %s285
        %v288 = vld [vmem:[%s262] sm:$0xff]
        %v289 = vld [vmem:[%s262 + $0x8] sm:$0xff]
        %v290 = vld [vmem:[%s262 + $0x10] sm:$0xff]
        %v291 = vld [vmem:[%s262 + $0x18] sm:$0xff]
        %v292 = vpack.c.bf16 %v289, %v288
        %v293 = vpack.c.bf16 %v291, %v290
        %v294 = vld [vmem:[%s1] sm:$0xf]
        %v295 = vld [vmem:[%s1 + $0x4] sm:$0xf]
        %v296 = vld [vmem:[%s1 + $0x8] sm:$0xf]
        %v297 = vld [vmem:[%s1 + $0xc] sm:$0xf]
        %v298 = vld [vmem:[%s1 + $0x10] sm:$0xf]
        %v299 = vld [vmem:[%s1 + $0x14] sm:$0xf]
        %v300 = vld [vmem:[%s1 + $0x18] sm:$0xf]
        %v301 = vld [vmem:[%s1 + $0x1c] sm:$0xf]
        %v302 = vld [vmem:[%s1 + $0x20] sm:$0xf]
        %v303 = vld [vmem:[%s1 + $0x24] sm:$0xf]
        %v304 = vld [vmem:[%s1 + $0x28] sm:$0xf]
        %v305 = vld [vmem:[%s1 + $0x2c] sm:$0xf]
        %v306 = vld [vmem:[%s1 + $0x30] sm:$0xf]
        %v307 = vld [vmem:[%s1 + $0x34] sm:$0xf]
        %v308 = vld [vmem:[%s1 + $0x38] sm:$0xf]
        %v309 = vld [vmem:[%s1 + $0x3c] sm:$0xf]
        %v310 = vld [vmem:[%s2] sm:$0xff]
        %v311 = vld [vmem:[%s2 + $0x8] sm:$0xff]
        %v312 = vld [vmem:[%s2 + $0x10] sm:$0xff]
        %v313 = vld [vmem:[%s2 + $0x18] sm:$0xff]
        %v314 = vld [vmem:[%s2 + $0x20] sm:$0xff]
        %v315 = vld [vmem:[%s2 + $0x28] sm:$0xff]
        %v316 = vld [vmem:[%s2 + $0x30] sm:$0xff]
        %v317 = vld [vmem:[%s2 + $0x38] sm:$0xff]
        %v318 = vld [vmem:[%s2 + $0x40] sm:$0xff]
        %v319 = vld [vmem:[%s2 + $0x48] sm:$0xff]
        %v320 = vld [vmem:[%s2 + $0x50] sm:$0xff]
        %v321 = vld [vmem:[%s2 + $0x58] sm:$0xff]
        %v322 = vld [vmem:[%s2 + $0x60] sm:$0xff]
        %v323 = vld [vmem:[%s2 + $0x68] sm:$0xff]
        %v324 = vld [vmem:[%s2 + $0x70] sm:$0xff]
        %v325 = vld [vmem:[%s2 + $0x78] sm:$0xff]
        %327 = vset.pattern.permute.xlu0 0
        %328 = vperm.xlu0 %327, %v310
        %v329 = vpop.permute.xlu0 %328
        %332 = vset.pattern.permute.xlu0 0
        %333 = vperm.xlu0 %332, %v311
        %v334 = vpop.permute.xlu0 %333
        %337 = vset.pattern.permute.xlu0 0
        %338 = vperm.xlu0 %337, %v312
        %v339 = vpop.permute.xlu0 %338
        %342 = vset.pattern.permute.xlu0 0
        %343 = vperm.xlu0 %342, %v313
        %v344 = vpop.permute.xlu0 %343
        %347 = vset.pattern.permute.xlu0 0
        %348 = vperm.xlu0 %347, %v314
        %v349 = vpop.permute.xlu0 %348
        %352 = vset.pattern.permute.xlu0 0
        %353 = vperm.xlu0 %352, %v315
        %v354 = vpop.permute.xlu0 %353
        %357 = vset.pattern.permute.xlu0 0
        %358 = vperm.xlu0 %357, %v316
        %v359 = vpop.permute.xlu0 %358
        %362 = vset.pattern.permute.xlu0 0
        %363 = vperm.xlu0 %362, %v317
        %v364 = vpop.permute.xlu0 %363
        %367 = vset.pattern.permute.xlu0 0
        %368 = vperm.xlu0 %367, %v318
        %v369 = vpop.permute.xlu0 %368
        %372 = vset.pattern.permute.xlu0 0
        %373 = vperm.xlu0 %372, %v319
        %v374 = vpop.permute.xlu0 %373
        %377 = vset.pattern.permute.xlu0 0
        %378 = vperm.xlu0 %377, %v320
        %v379 = vpop.permute.xlu0 %378
        %382 = vset.pattern.permute.xlu0 0
        %383 = vperm.xlu0 %382, %v321
        %v384 = vpop.permute.xlu0 %383
        %387 = vset.pattern.permute.xlu0 0
        %388 = vperm.xlu0 %387, %v322
        %v389 = vpop.permute.xlu0 %388
        %392 = vset.pattern.permute.xlu0 0
        %393 = vperm.xlu0 %392, %v323
        %v394 = vpop.permute.xlu0 %393
        %397 = vset.pattern.permute.xlu0 0
        %398 = vperm.xlu0 %397, %v324
        %v399 = vpop.permute.xlu0 %398
        %402 = vset.pattern.permute.xlu0 0
        %403 = vperm.xlu0 %402, %v325
        %v404 = vpop.permute.xlu0 %403
        %v422 = vunpack.c.l.b16 %v294
        %v423 = vunpack.c.l.b16 %v295
        %v424 = vunpack.c.l.b16 %v296
        %v425 = vunpack.c.l.b16 %v297
        %v426 = vunpack.c.l.b16 %v298
        %v427 = vunpack.c.l.b16 %v299
        %v428 = vunpack.c.l.b16 %v300
        %v429 = vunpack.c.l.b16 %v301
        %v430 = vunpack.c.l.b16 %v302
        %v431 = vunpack.c.l.b16 %v303
        %v432 = vunpack.c.l.b16 %v304
        %v433 = vunpack.c.l.b16 %v305
        %v434 = vunpack.c.l.b16 %v306
        %v435 = vunpack.c.l.b16 %v307
        %v436 = vunpack.c.l.b16 %v308
        %v437 = vunpack.c.l.b16 %v309
        %v438 = vpack.c.b16 %v423, %v422
        %v439 = vpack.c.b16 %v425, %v424
        %v440 = vpack.c.b16 %v427, %v426
        %v441 = vpack.c.b16 %v429, %v428
        %v442 = vpack.c.b16 %v431, %v430
        %v443 = vpack.c.b16 %v433, %v432
        %v444 = vpack.c.b16 %v435, %v434
        %v445 = vpack.c.b16 %v437, %v436
        %vm446 = vcmask 261120
        %v448 = vsel %vm446, %v438, 0
        %v451 = vsel %vm446, %v439, 0
        %v454 = vsel %vm446, %v440, 0
        %v457 = vsel %vm446, %v441, 0
        %v460 = vsel %vm446, %v442, 0
        %v463 = vsel %vm446, %v443, 0
        %v466 = vsel %vm446, %v444, 0
        %v469 = vsel %vm446, %v445, 0
        %471 = vmatprep.subr.bf16.mxu0 0
        %472 = vmatpush1.bf16.msra.mxu0 %v292
        %473 = vmatprep.subr.bf16.mxu0 0
        %474 = vmatpush1.bf16.msra.mxu0 %v293
        %475 = vmatprep.subr.bf16.mxu0 0
        %476 = vmatpush1.bf16.msra.mxu0 0
        %477 = vmatprep.subr.bf16.mxu0 0
        %478 = vmatpush1.bf16.msra.mxu0 0
        %479 = vmatprep.subr.bf16.mxu0 0
        %480 = vmatpush1.bf16.msra.mxu0 0
        %481 = vmatprep.subr.bf16.mxu0 0
        %482 = vmatpush1.bf16.msra.mxu0 0
        %483 = vmatprep.subr.bf16.mxu0 0
        %484 = vmatpush1.bf16.msra.mxu0 0
        %485 = vmatprep.subr.bf16.mxu0 0
        %486 = vmatpush1.bf16.msra.mxu0 0
        %487 = vmatprep.subr.bf16.mxu0 0
        %488 = vmatpush1.bf16.msra.mxu0 0
        %489 = vmatprep.subr.bf16.mxu0 0
        %490 = vmatpush1.bf16.msra.mxu0 0
        %491 = vmatprep.subr.bf16.mxu0 0
        %492 = vmatpush1.bf16.msra.mxu0 0
        %493 = vmatprep.subr.bf16.mxu0 0
        %494 = vmatpush1.bf16.msra.mxu0 0
        %495 = vmatprep.subr.bf16.mxu0 0
        %496 = vmatpush1.bf16.msra.mxu0 0
        %497 = vmatprep.subr.bf16.mxu0 0
        %498 = vmatpush1.bf16.msra.mxu0 0
        %499 = vmatprep.subr.bf16.mxu0 0
        %500 = vmatpush1.bf16.msra.mxu0 0
        %501 = vmatprep.subr.bf16.mxu0 0
        %502 = vmatpush1.bf16.msra.mxu0 0
        %503 = vmatprep.mubr.bf16.mxu0 0
        %504 = vmatmul.mubr.bf16.gmra.mrb[0].mxu0 %v448
        %v505 = vpop.f32.mrb[0].mxu0
        %v506 = vadd.f32 %v329, %v505
        %v507 = vpop.f32.mrb[0].mxu0
        %v508 = vpop.f32.mrb[0].mxu0
        %v509 = vadd.f32 %v334, %v508
        %v510 = vpop.f32.mrb[0].mxu0
        %511 = vmatprep.mubr.bf16.mxu0 0
        %512 = vmatmul.mubr.bf16.gmra.mrb[0].mxu0 %v451
        %v513 = vpop.f32.mrb[0].mxu0
        %v514 = vadd.f32 %v339, %v513
        %v515 = vpop.f32.mrb[0].mxu0
        %v516 = vpop.f32.mrb[0].mxu0
        %v517 = vadd.f32 %v344, %v516
        %v518 = vpop.f32.mrb[0].mxu0
        %519 = vmatprep.mubr.bf16.mxu0 0
        %520 = vmatmul.mubr.bf16.gmra.mrb[0].mxu0 %v454
        %v521 = vpop.f32.mrb[0].mxu0
        %v522 = vadd.f32 %v349, %v521
        %v523 = vpop.f32.mrb[0].mxu0
        %v524 = vpop.f32.mrb[0].mxu0
        %v525 = vadd.f32 %v354, %v524
        %v526 = vpop.f32.mrb[0].mxu0
        %527 = vmatprep.mubr.bf16.mxu0 0
        %528 = vmatmul.mubr.bf16.gmra.mrb[0].mxu0 %v457
        %v529 = vpop.f32.mrb[0].mxu0
        %v530 = vadd.f32 %v359, %v529
        %v531 = vpop.f32.mrb[0].mxu0
        %v532 = vpop.f32.mrb[0].mxu0
        %v533 = vadd.f32 %v364, %v532
        %v534 = vpop.f32.mrb[0].mxu0
        %535 = vmatprep.mubr.bf16.mxu0 0
        %536 = vmatmul.mubr.bf16.gmra.mrb[0].mxu0 %v460
        %v537 = vpop.f32.mrb[0].mxu0
        %v538 = vadd.f32 %v369, %v537
        %v539 = vpop.f32.mrb[0].mxu0
        %v540 = vpop.f32.mrb[0].mxu0
        %v541 = vadd.f32 %v374, %v540
        %v542 = vpop.f32.mrb[0].mxu0
        %543 = vmatprep.mubr.bf16.mxu0 0
        %544 = vmatmul.mubr.bf16.gmra.mrb[0].mxu0 %v463
        %v545 = vpop.f32.mrb[0].mxu0
        %v546 = vadd.f32 %v379, %v545
        %v547 = vpop.f32.mrb[0].mxu0
        %v548 = vpop.f32.mrb[0].mxu0
        %v549 = vadd.f32 %v384, %v548
        %v550 = vpop.f32.mrb[0].mxu0
        %551 = vmatprep.mubr.bf16.mxu0 0
        %552 = vmatmul.mubr.bf16.gmra.mrb[0].mxu0 %v466
        %v553 = vpop.f32.mrb[0].mxu0
        %v554 = vadd.f32 %v389, %v553
        %v555 = vpop.f32.mrb[0].mxu0
        %v556 = vpop.f32.mrb[0].mxu0
        %v557 = vadd.f32 %v394, %v556
        %v558 = vpop.f32.mrb[0].mxu0
        %559 = vmatprep.mubr.bf16.mxu0 0
        %560 = vmatmul.mubr.bf16.gmra.mrb[0].mxu0 %v469
        %v561 = vpop.f32.mrb[0].mxu0
        %v562 = vadd.f32 %v399, %v561
        %v563 = vpop.f32.mrb[0].mxu0
        %v564 = vpop.f32.mrb[0].mxu0
        %v565 = vadd.f32 %v404, %v564
        %v566 = vpop.f32.mrb[0].mxu0
        %567 = vdwg.mxu0
        %v568 = vxor.u32 %v506, 2147483648
        %v569 = vxor.u32 %v509, 2147483648
        %v570 = vxor.u32 %v514, 2147483648
        %v571 = vxor.u32 %v517, 2147483648
        %v572 = vxor.u32 %v522, 2147483648
        %v573 = vxor.u32 %v525, 2147483648
        %v574 = vxor.u32 %v530, 2147483648
        %v575 = vxor.u32 %v533, 2147483648
        %v576 = vxor.u32 %v538, 2147483648
        %v577 = vxor.u32 %v541, 2147483648
        %v578 = vxor.u32 %v546, 2147483648
        %v579 = vxor.u32 %v549, 2147483648
        %v580 = vxor.u32 %v554, 2147483648
        %v581 = vxor.u32 %v557, 2147483648
        %v582 = vxor.u32 %v562, 2147483648
        %v583 = vxor.u32 %v565, 2147483648
        %v584 = vmul.f32 %v568, 1.442695
        %v585 = vpow.pop %v584
        %v586 = vmul.f32 %v569, 1.442695
        %v587 = vpow.pop %v586
        %v588 = vmul.f32 %v570, 1.442695
        %v589 = vpow.pop %v588
        %v590 = vmul.f32 %v571, 1.442695
        %v591 = vpow.pop %v590
        %v592 = vmul.f32 %v572, 1.442695
        %v593 = vpow.pop %v592
        %v594 = vmul.f32 %v573, 1.442695
        %v595 = vpow.pop %v594
        %v596 = vmul.f32 %v574, 1.442695
        %v597 = vpow.pop %v596
        %v598 = vmul.f32 %v575, 1.442695
        %v599 = vpow.pop %v598
        %v600 = vmul.f32 %v576, 1.442695
        %v601 = vpow.pop %v600
        %v602 = vmul.f32 %v577, 1.442695
        %v603 = vpow.pop %v602
        %v604 = vmul.f32 %v578, 1.442695
        %v605 = vpow.pop %v604
        %v606 = vmul.f32 %v579, 1.442695
        %v607 = vpow.pop %v606
        %v608 = vmul.f32 %v580, 1.442695
        %v609 = vpow.pop %v608
        %v610 = vmul.f32 %v581, 1.442695
        %v611 = vpow.pop %v610
        %v612 = vmul.f32 %v582, 1.442695
        %v613 = vpow.pop %v612
        %v614 = vmul.f32 %v583, 1.442695
        %v615 = vpow.pop %v614
        %v616 = vadd.f32 %v585, 1.0
        %v617 = vadd.f32 %v587, 1.0
        %v618 = vadd.f32 %v589, 1.0
        %v619 = vadd.f32 %v591, 1.0
        %v620 = vadd.f32 %v593, 1.0
        %v621 = vadd.f32 %v595, 1.0
        %v622 = vadd.f32 %v597, 1.0
        %v623 = vadd.f32 %v599, 1.0
        %v624 = vadd.f32 %v601, 1.0
        %v625 = vadd.f32 %v603, 1.0
        %v626 = vadd.f32 %v605, 1.0
        %v627 = vadd.f32 %v607, 1.0
        %v628 = vadd.f32 %v609, 1.0
        %v629 = vadd.f32 %v611, 1.0
        %v630 = vadd.f32 %v613, 1.0
        %v631 = vadd.f32 %v615, 1.0
        %v632 = vrcp.pop %v616
        %v633 = vmul.f32 1.0, %v632
        %v634 = vrcp.pop %v617
        %v635 = vmul.f32 1.0, %v634
        %v636 = vrcp.pop %v618
        %v637 = vmul.f32 1.0, %v636
        %v638 = vrcp.pop %v619
        %v639 = vmul.f32 1.0, %v638
        %v640 = vrcp.pop %v620
        %v641 = vmul.f32 1.0, %v640
        %v642 = vrcp.pop %v621
        %v643 = vmul.f32 1.0, %v642
        %v644 = vrcp.pop %v622
        %v645 = vmul.f32 1.0, %v644
        %v646 = vrcp.pop %v623
        %v647 = vmul.f32 1.0, %v646
        %v648 = vrcp.pop %v624
        %v649 = vmul.f32 1.0, %v648
        %v650 = vrcp.pop %v625
        %v651 = vmul.f32 1.0, %v650
        %v652 = vrcp.pop %v626
        %v653 = vmul.f32 1.0, %v652
        %v654 = vrcp.pop %v627
        %v655 = vmul.f32 1.0, %v654
        %v656 = vrcp.pop %v628
        %v657 = vmul.f32 1.0, %v656
        %v658 = vrcp.pop %v629
        %v659 = vmul.f32 1.0, %v658
        %v660 = vrcp.pop %v630
        %v661 = vmul.f32 1.0, %v660
        %v662 = vrcp.pop %v631
        %v663 = vmul.f32 1.0, %v662
        %v664 = vmul.f32 %v506, %v633
        %v665 = vmul.f32 %v509, %v635
        %v666 = vmul.f32 %v514, %v637
        %v667 = vmul.f32 %v517, %v639
        %v668 = vmul.f32 %v522, %v641
        %v669 = vmul.f32 %v525, %v643
        %v670 = vmul.f32 %v530, %v645
        %v671 = vmul.f32 %v533, %v647
        %v672 = vmul.f32 %v538, %v649
        %v673 = vmul.f32 %v541, %v651
        %v674 = vmul.f32 %v546, %v653
        %v675 = vmul.f32 %v549, %v655
        %v676 = vmul.f32 %v554, %v657
        %v677 = vmul.f32 %v557, %v659
        %v678 = vmul.f32 %v562, %v661
        %v679 = vmul.f32 %v565, %v663
        %v680 = vld [vmem:[%s3] sm:$0xf]
        %v681 = vld [vmem:[%s3 + $0x4] sm:$0xf]
        %v682 = vld [vmem:[%s3 + $0x8] sm:$0xf]
        %v683 = vld [vmem:[%s3 + $0xc] sm:$0xf]
        %v684 = vpack.c.bf16 %v665, %v664
        %v685 = vpack.c.bf16 %v667, %v666
        %v686 = vpack.c.bf16 %v669, %v668
        %v687 = vpack.c.bf16 %v671, %v670
        %v688 = vpack.c.bf16 %v673, %v672
        %v689 = vpack.c.bf16 %v675, %v674
        %v690 = vpack.c.bf16 %v677, %v676
        %v691 = vpack.c.bf16 %v679, %v678
        %v692 = vld [vmem:[%s4] sm:$0xff]
        %v693 = vld [vmem:[%s4 + $0x8] sm:$0xff]
        %v694 = vld [vmem:[%s4 + $0x10] sm:$0xff]
        %v695 = vld [vmem:[%s4 + $0x18] sm:$0xff]
        %697 = vset.pattern.permute.xlu0 0
        %698 = vperm.xlu0 %697, %v692
        %v699 = vpop.permute.xlu0 %698
        %702 = vset.pattern.permute.xlu0 0
        %703 = vperm.xlu0 %702, %v693
        %v704 = vpop.permute.xlu0 %703
        %707 = vset.pattern.permute.xlu0 0
        %708 = vperm.xlu0 %707, %v694
        %v709 = vpop.permute.xlu0 %708
        %712 = vset.pattern.permute.xlu0 0
        %713 = vperm.xlu0 %712, %v695
        %v714 = vpop.permute.xlu0 %713
        %v720 = vunpack.c.l.b16 %v680
        %v721 = vunpack.c.l.b16 %v681
        %v722 = vunpack.c.l.b16 %v682
        %v723 = vunpack.c.l.b16 %v683
        %v724 = vpack.c.b16 %v721, %v720
        %v725 = vpack.c.b16 %v723, %v722
        %728 = vmatprep.subr.bf16.mxu0 0
        %729 = vmatpush1.bf16.msra.mxu0 %v684
        %730 = vmatprep.subr.bf16.mxu0 0
        %731 = vmatpush1.bf16.msra.mxu0 %v685
        %732 = vmatprep.subr.bf16.mxu0 0
        %733 = vmatpush1.bf16.msra.mxu0 %v686
        %734 = vmatprep.subr.bf16.mxu0 0
        %735 = vmatpush1.bf16.msra.mxu0 %v687
        %736 = vmatprep.subr.bf16.mxu0 0
        %737 = vmatpush1.bf16.msra.mxu0 %v688
        %738 = vmatprep.subr.bf16.mxu0 0
        %739 = vmatpush1.bf16.msra.mxu0 %v689
        %740 = vmatprep.subr.bf16.mxu0 0
        %741 = vmatpush1.bf16.msra.mxu0 %v690
        %742 = vmatprep.subr.bf16.mxu0 0
        %743 = vmatpush1.bf16.msra.mxu0 %v691
        %744 = vmatprep.subr.bf16.mxu0 0
        %745 = vmatpush1.bf16.msra.mxu0 0
        %746 = vmatprep.subr.bf16.mxu0 0
        %747 = vmatpush1.bf16.msra.mxu0 0
        %748 = vmatprep.subr.bf16.mxu0 0
        %749 = vmatpush1.bf16.msra.mxu0 0
        %750 = vmatprep.subr.bf16.mxu0 0
        %751 = vmatpush1.bf16.msra.mxu0 0
        %752 = vmatprep.subr.bf16.mxu0 0
        %753 = vmatpush1.bf16.msra.mxu0 0
        %754 = vmatprep.subr.bf16.mxu0 0
        %755 = vmatpush1.bf16.msra.mxu0 0
        %756 = vmatprep.subr.bf16.mxu0 0
        %757 = vmatpush1.bf16.msra.mxu0 0
        %758 = vmatprep.subr.bf16.mxu0 0
        %759 = vmatpush1.bf16.msra.mxu0 0
        %760 = vmatprep.mubr.bf16.mxu0 0
        %761 = vmatmul.mubr.bf16.gmra.mrb[0].mxu0 %v724
        %v762 = vpop.f32.mrb[0].mxu0
        %v763 = vadd.f32 %v699, %v762
        %v764 = vpop.f32.mrb[0].mxu0
        %v765 = vpop.f32.mrb[0].mxu0
        %v766 = vadd.f32 %v704, %v765
        %v767 = vpop.f32.mrb[0].mxu0
        %768 = vmatprep.mubr.bf16.mxu0 0
        %769 = vmatmul.mubr.bf16.gmra.mrb[0].mxu0 %v725
        %v770 = vpop.f32.mrb[0].mxu0
        %v771 = vadd.f32 %v709, %v770
        %v772 = vpop.f32.mrb[0].mxu0
        %v773 = vpop.f32.mrb[0].mxu0
        %v774 = vadd.f32 %v714, %v773
        %v775 = vpop.f32.mrb[0].mxu0
        %776 = vdwg.mxu0
        %777 = vst [vmem:[%s286] sm:$0xff] %v763
        %778 = vst [vmem:[%s286 + $0x8] sm:$0xff] %v766
        %779 = vst [vmem:[%s286 + $0x10] sm:$0xff] %v771
        %780 = vst [vmem:[%s286 + $0x18] sm:$0xff] %v774
        %s781 = sand.u32 %s153, 1
        %s782 = scalar_lea.sflag [#allocation4], %s781
        %s783 = sand.u32 %s153, 1
        %s784 = smul.addr %s783, 32
        %s785 = scalar_lea.vmem [#allocation3], %s784
        // Predicated region
        $region79: #{tpu_custom_call.1} parent=73 // pred_check
          %p786 = pneg %p163
        $region80: #{tpu_custom_call.1} parent=73 // pred_check_branch
          %788 = sbr.rel (%p786) target = $region82
        $region81: #{tpu_custom_call.1} parent=73 // pred_region
          %s790 = ssub.s32 512, 512
          %791 = vsyncadd %s782, %s790
          %s792 = smul.addr %s23, 8
          %s793 = sadd.s32 %s24, %s792
          %s794 = smul.addr %s793, 128
          %s795 = scalar_lea.hbm %s5, %s794
          %s796 = sshll.u32 %s785, 4
          %s797 = int_to_ptr.vmem [resolvable:$true] %s796
          %802 = dma.vmem_to_hbm [thread:$0]  %s797, 512, %s795, %s782, 128, 256, 8
        $region82: #{tpu_custom_call.1} parent=73 // pred_fallthru
          _
      $region74: #{tpu_custom_call.1} parent=5 // pred_fallthru
        _
      %p803 = scmp.le.s32.totalorder 2, %s14
      // Predicated region
      $region83: #{tpu_custom_call.1} parent=5 // pred_check
        %p804 = pneg %p803
      $region84: #{tpu_custom_call.1} parent=5 // pred_check_branch
        %806 = sbr.rel (%p804) target = $region86
      $region85: #{tpu_custom_call.1} parent=5 // pred_region
        %s807 = ssub.s32 %s14, 2
        // Predicated region
        $region87: #{tpu_custom_call.1} parent=85 // pred_check
          %p808 = pneg %p169
        $region88: #{tpu_custom_call.1} parent=85 // pred_check_branch
          %810 = sbr.rel (%p808) target = $region90
        $region89: #{tpu_custom_call.1} parent=85 // pred_region
          %s811 = sand.u32 %s154, 1
          %s812 = scalar_lea.sflag [#allocation4], %s811
          %s813 = sand.u32 %s154, 1
          %s814 = smul.addr %s813, 32
          %s815 = scalar_lea.vmem [#allocation3], %s814
          %816 = dma.done %s812, 512
        $region90: #{tpu_custom_call.1} parent=85 // pred_fallthru
          _
      $region86: #{tpu_custom_call.1} parent=5 // pred_fallthru
        _
    $region6: #{tpu_custom_call.1} parent=1 // loop_footer
      %s18 = sadd.s32 1, %s14
    $region7: #{tpu_custom_call.1} parent=1 // loop_footer_branch
      %13 = sbr.rel target = $region3
    $region8: #{tpu_custom_call.1} parent=1 // loop_exit
      _
    %817 = vsyncpa [#allocation4], 1
    %s818 = scalar_lea.sflag [#allocation4], 1
    %819 = vsyncpa %s818, 1

</llo_original>
